<compile_context>
chip_gen: v5e
topology: v5e:2x2
jax: 0.10.0
libtpu: 0.0.40
codegen_flags: <defaults>
</compile_context>

<pallas_src>
import jax
import jax.numpy as jnp
from jax.experimental import pallas as pl
from jax.experimental.pallas import tpu as pltpu


def _round_up(x, m):
    return ((x + m - 1) // m) * m


def _conv_bn_relu_kernel(x_ref, w_ref, b_ref, o_ref):
    # x_ref: (C_in, TL)   w_ref: (C_out, C_in)   b_ref: (C_out, 1)
    # o_ref: (C_out, TL)
    y = jnp.dot(w_ref[...], x_ref[...], preferred_element_type=jnp.float32)
    y = y + b_ref[...]                       # folded conv-bias + BN shift (f32)
    o_ref[...] = jnp.maximum(y, 0.0).astype(o_ref.dtype)


def conv_bn_relu_1d(x, weight, bias, gamma, beta, running_mean, running_var,
                    *, eps=1e-5, compute_dtype=jnp.bfloat16, out_dtype=None,
                    target_step_bytes=2 * 1024 * 1024):
    """ReLU(BatchNorm1d(Conv1d(x, kernel_size=1))) in eval mode.

    x: (N, C_in, L) ; weight: (C_out, C_in) or (C_out, C_in, 1); returns
    (N, C_out, L) in `out_dtype` (defaults to x.dtype).

    compute_dtype: dtype x / folded-W are streamed in (default bf16 — halves
    HBM read bytes and doubles MXU rate on v6e/v7x; accumulation is f32).
    Pass jnp.float32 for a bit-exact fold.
    """
    N, C_in, L = x.shape
    C_out = weight.shape[0]
    if out_dtype is None:
        out_dtype = x.dtype
    if compute_dtype is None:
        compute_dtype = x.dtype

    # ---- Fold BN (eval form) and conv bias into the weights (exact, f32) ----
    inv_std = jax.lax.rsqrt(running_var.astype(jnp.float32) + eps)
    scale = gamma.astype(jnp.float32) * inv_std                        # (C_out,)
    w_folded = weight.reshape(C_out, C_in).astype(jnp.float32) * scale[:, None]
    b_folded = (bias.astype(jnp.float32)
                - running_mean.astype(jnp.float32)) * scale + beta.astype(jnp.float32)

    x_c = x.astype(compute_dtype)
    w_c = w_folded.astype(compute_dtype)
    b_c = b_folded.reshape(C_out, 1)          # keep f32 for the bias add

    in_isz = jnp.dtype(compute_dtype).itemsize
    out_isz = jnp.dtype(out_dtype).itemsize

    # ---- VMEM budget (generation aware; conservative 64 MiB fallback) ----
    try:
        vmem_cap = int(pltpu.get_tpu_info().vmem_capacity_bytes)
    except Exception:
        vmem_cap = 64 * 1024 * 1024
    vmem_budget = min((vmem_cap * 3) // 4, 100 * 1024 * 1024)

    # ---- Adaptive L tiling (NCL layout: L stays on the lane axis) ----
    col_bytes = C_in * in_isz + C_out * out_isz          # x + out bytes per column
    weight_bytes = 2 * C_out * C_in * in_isz + 2 * C_out * 4  # resident W + b (2-buffered bound)

    if L <= 128:
        tile_l = L                                        # block == full dim, no masking needed
    else:
        # big enough that each grid step moves ~target_step_bytes of HBM traffic
        tile_l = max(128, target_step_bytes // max(col_bytes, 1))
        # keep double-buffered x/out tiles + resident weight within VMEM budget
        avail = max(vmem_budget - weight_bytes, 2 * 128 * col_bytes)
        tile_l_vmem = max(128, avail // (2 * col_bytes))
        tile_l = min(tile_l, tile_l_vmem, _round_up(L, 128))
        tile_l = max(128, (tile_l // 128) * 128)
        # megacore (v7x): guarantee >= 2 total grid steps when N == 1
        if N == 1 and pl.cdiv(L, tile_l) < 2:
            tile_l = max(128, _round_up(pl.cdiv(L, 2), 128))

    n_l = pl.cdiv(L, tile_l)
    grid = (N, n_l)

    cost = pl.CostEstimate(
        flops=2 * N * L * C_in * C_out,
        transcendentals=0,
        bytes_accessed=(N * C_in * L * in_isz
                        + N * C_out * L * out_isz
                        + C_out * C_in * in_isz
                        + C_out * 4),
    )

    out = pl.pallas_call(
        _conv_bn_relu_kernel,
        out_shape=jax.ShapeDtypeStruct((N, C_out, L), out_dtype),
        grid=grid,
        in_specs=[
            pl.BlockSpec((None, C_in, tile_l), lambda n, l: (n, 0, l)),  # x tile
            pl.BlockSpec((C_out, C_in), lambda n, l: (0, 0)),            # folded W (resident)
            pl.BlockSpec((C_out, 1), lambda n, l: (0, 0)),               # folded b (resident)
        ],
        out_specs=pl.BlockSpec((None, C_out, tile_l), lambda n, l: (n, 0, l)),
        compiler_params=pltpu.CompilerParams(
            dimension_semantics=("parallel", "parallel"),
            vmem_limit_bytes=int(vmem_budget)),
        cost_estimate=cost,
    )(x_c, w_c, b_c)

    return out


def _reference(x, weight, bias, gamma, beta, mean, var, eps=1e-5):
    # pure-JAX reference of the same eval-mode semantics
    conv = jnp.einsum('ncl,oc->nol', x, weight.reshape(weight.shape[0], -1)) \
        + bias[None, :, None]
    bn = gamma[None, :, None] * (conv - mean[None, :, None]) \
        / jnp.sqrt(var[None, :, None] + eps) + beta[None, :, None]
    return jnp.maximum(bn, 0.0)


if __name__ == "__main__":
    key = jax.random.PRNGKey(0)
    N, C_in, C_out, L = 2, 4, 8, 16

    k = jax.random.split(key, 6)
    x = jax.random.normal(k[0], (N, C_in, L), dtype=jnp.float32)
    # Conv1d(kernel_size=1) weight shape: (C_out, C_in, 1); bias: (C_out,)
    weight = jax.random.normal(k[1], (C_out, C_in, 1), dtype=jnp.float32) * 0.5
    bias = jax.random.normal(k[2], (C_out,), dtype=jnp.float32) * 0.1
    # BatchNorm1d params (eval-mode / running stats), deterministic init
    gamma = jnp.ones((C_out,), jnp.float32) \
        + 0.1 * jax.random.normal(k[3], (C_out,), dtype=jnp.float32)
    beta = 0.1 * jax.random.normal(k[4], (C_out,), dtype=jnp.float32)
    running_mean = 0.1 * jax.random.normal(k[5], (C_out,), dtype=jnp.float32)
    running_var = jnp.ones((C_out,), jnp.float32)

    w2d = weight.reshape(C_out, C_in)
    ref = _reference(x, weight, bias, gamma, beta, running_mean, running_var)

    # 1) Default fast path: bf16 streaming, f32 accumulation (loose tolerance).
    out_bf16 = conv_bn_relu_1d(x, w2d, bias, gamma, beta,
                               running_mean, running_var)
    out_bf16 = jax.block_until_ready(out_bf16)
    assert out_bf16.shape == (N, C_out, L), out_bf16.shape
    assert jnp.allclose(out_bf16, ref, atol=5e-2, rtol=5e-2), \
        float(jnp.max(jnp.abs(out_bf16 - ref)))

    # 2) Exact path: f32 streaming (tight tolerance).
    out_f32 = conv_bn_relu_1d(x, w2d, bias, gamma, beta,
                              running_mean, running_var,
                              compute_dtype=jnp.float32)
    out_f32 = jax.block_until_ready(out_f32)
    assert jnp.allclose(out_f32, ref, atol=1e-5, rtol=1e-5), \
        float(jnp.max(jnp.abs(out_f32 - ref)))

    # 3) Ragged L-block path (L > 128, not a multiple of tile_l) — exercises
    #    masked last-tile reads/writes with no padding / slicing in the wrapper.
    N2, L2 = 1, 200
    k2 = jax.random.split(jax.random.PRNGKey(1), 2)
    x2 = jax.random.normal(k2[0], (N2, C_in, L2), dtype=jnp.float32)
    ref2 = _reference(x2, weight, bias, gamma, beta, running_mean, running_var)
    out2 = conv_bn_relu_1d(x2, w2d, bias, gamma, beta,
                           running_mean, running_var,
                           compute_dtype=jnp.float32)
    out2 = jax.block_until_ready(out2)
    assert out2.shape == (N2, C_out, L2), out2.shape
    assert jnp.allclose(out2, ref2, atol=1e-5, rtol=1e-5), \
        float(jnp.max(jnp.abs(out2 - ref2)))

    print("KERNEL_OK")
</pallas_src>

<mosaic_0001>
module attributes {stable_mosaic.version = 11 : i64} {
  func.func @_conv_bn_relu_kernel(%arg0: i32, %arg1: i32, %arg2: memref<1x4x16xbf16, #tpu.memory_space<vmem>>, %arg3: memref<8x4xbf16, #tpu.memory_space<vmem>>, %arg4: memref<8x1xf32, #tpu.memory_space<vmem>>, %arg5: memref<1x8x16xf32, #tpu.memory_space<vmem>>) attributes {dimension_semantics = [#tpu.dimension_semantics<parallel>, #tpu.dimension_semantics<parallel>], iteration_bounds = array<i64: 2, 1>, scalar_prefetch = 0 : i64, scratch_operands = 0 : i64, tpu.core_type = #tpu.core_type<tc>, window_params = [{transform_indices = @transform_0, window_bounds = array<i64: 1, 4, 16>}, {pipeline_mode = #tpu.pipeline_mode<synchronous>, transform_indices = @transform_1, window_bounds = array<i64: 8, 4>}, {pipeline_mode = #tpu.pipeline_mode<synchronous>, transform_indices = @transform_2, window_bounds = array<i64: 8, 1>}, {transform_indices = @transform_3, window_bounds = array<i64: 1, 8, 16>}]} {
    %c0 = arith.constant 0 : index
    %c0_0 = arith.constant 0 : index
    %0 = vector.load %arg3[%c0, %c0_0] : memref<8x4xbf16, #tpu.memory_space<vmem>>, vector<8x4xbf16>
    %c0_1 = arith.constant 0 : index
    %c0_2 = arith.constant 0 : index
    %c0_3 = arith.constant 0 : index
    %1 = vector.load %arg2[%c0_1, %c0_2, %c0_3] : memref<1x4x16xbf16, #tpu.memory_space<vmem>>, vector<1x4x16xbf16>
    %2 = vector.shape_cast %1 : vector<1x4x16xbf16> to vector<4x16xbf16>
    %cst = arith.constant dense<0.000000e+00> : vector<8x16xf32>
    %3 = tpu.matmul %0, %2, %cst {dimension_numbers = #tpu.dot_dimension_numbers<[1], [0], [0], [1], [0, 0, 1, 1], [], []>} : vector<8x4xbf16>, vector<4x16xbf16>, vector<8x16xf32> -> vector<8x16xf32>
    %c0_4 = arith.constant 0 : index
    %c0_5 = arith.constant 0 : index
    %4 = vector.load %arg4[%c0_4, %c0_5] : memref<8x1xf32, #tpu.memory_space<vmem>>, vector<8x1xf32>
    %5 = vector.broadcast %4 : vector<8x1xf32> to vector<8x16xf32>
    %6 = arith.addf %3, %5 : vector<8x16xf32>
    %cst_6 = arith.constant 0.000000e+00 : f32
    %7 = vector.broadcast %cst_6 : f32 to vector<8x16xf32>
    %8 = arith.maximumf %6, %7 : vector<8x16xf32>
    %c0_7 = arith.constant 0 : index
    %c0_8 = arith.constant 0 : index
    %c0_9 = arith.constant 0 : index
    %9 = vector.load %arg5[%c0_7, %c0_8, %c0_9] : memref<1x8x16xf32, #tpu.memory_space<vmem>>, vector<1x8x16xf32>
    %10 = vector.shape_cast %9 : vector<1x8x16xf32> to vector<8x16xf32>
    %11 = vector.shape_cast %8 : vector<8x16xf32> to vector<1x8x16xf32>
    tpu.vector_store %arg5[%c0_7, %c0_8, %c0_9], %11 {strides = array<i32>} : memref<1x8x16xf32, #tpu.memory_space<vmem>>, vector<1x8x16xf32>,
    return
  }
  func.func @transform_0(%arg0: i32, %arg1: i32) -> (i32, i32, i32) {
    %c0_i32 = arith.constant 0 : i32
    %c0_i32_0 = arith.constant 0 : i32
    return %arg0, %c0_i32, %arg1 : i32, i32, i32
  }
  func.func @transform_1(%arg0: i32, %arg1: i32) -> (i32, i32) {
    %c0_i32 = arith.constant 0 : i32
    %c0_i32_0 = arith.constant 0 : i32
    %c0_i32_1 = arith.constant 0 : i32
    return %c0_i32, %c0_i32_0 : i32, i32
  }
  func.func @transform_2(%arg0: i32, %arg1: i32) -> (i32, i32) {
    %c0_i32 = arith.constant 0 : i32
    %c0_i32_0 = arith.constant 0 : i32
    %c0_i32_1 = arith.constant 0 : i32
    return %c0_i32, %c0_i32_0 : i32, i32
  }
  func.func @transform_3(%arg0: i32, %arg1: i32) -> (i32, i32, i32) {
    %c0_i32 = arith.constant 0 : i32
    %c0_i32_0 = arith.constant 0 : i32
    return %arg0, %c0_i32, %arg1 : i32, i32, i32
  }
}

</mosaic_0001>

<llo_original>
// kernel: tpu_custom_call.1
$region0: #{tpu_custom_call.1}
  #allocation0 [shape = 'u32[]', space=smem, size = 0x4, offset = 0x4, fixed_abs, tag = 'smem constant byte address 0x4 - core index']
  #allocation1 [shape = 'u32[72,128]{1,0:T(1,128)}', space=vmem, size = 0x9000, scoped, tag = 'internal scratch']
  %s0 = inlined_call_operand.vmem [shape: bf16[2,4,16], index: 0, kind: input, shape index: {}]
  %s1 = inlined_call_operand.vmem [shape: bf16[8,4], index: 1, kind: input, shape index: {}]
  %s2 = inlined_call_operand.vmem [shape: f32[8,1], index: 2, kind: input, shape index: {}]
  %s3 = inlined_call_operand.hbm [shape: f32[2,8,16], index: 3, kind: output, shape index: {}]
  %s4 = sld [smem:[#allocation0]]
  $region45: #{tpu_custom_call.1} parent=0
    _
  %s6 = ssub.s32 1, %s4
  %s7 = scalar_select 0, %s6, %s4
  $region1: #{tpu_custom_call.1} parent=0
    #allocation2 [shape = 'u8[8192]{0}', space=vmem, size = 0x2000, scoped, tag = 'output window, operand 0']
    #allocation3 [shape = 's32[2]{0}', space=sflag, size = 0x8, scoped, tag = 'scoped memory for tpu_custom_call.1']
    %8 = vsyncpa [#allocation3], 0
    %s9 = scalar_lea.sflag [#allocation3], 1
    %10 = vsyncpa %s9, 0
    loop: start=0, step=1, limit=4
    $region2: #{tpu_custom_call.1} parent=1 // loop_pre_header
      _
    $region3: #{tpu_custom_call.1} parent=1 // loop_header
      %s12 = sphi 0, %s16
      %p13 = scmp.ge.s32.totalorder %s12, 4
      %s19 = sphi 0, %s31
      %s20 = sphi 0, %s27
      %s21 = sphi 0, %s19
      %s22 = sphi 0, %s20
      %s23 = sphi 0, %s21
      %s24 = sphi 0, %s22
      %s36 = sphi 0, %s38
      %s39 = sphi 0, %s36
      %s40 = sphi 0, %s39
      %s56 = sphi 0, %s40
      %s60 = sphi 0, %s60
      %s62 = sphi 0, %s60
      %s63 = sphi 0, %s62
      %s77 = sphi 0, %s63
      %s81 = sphi 0, %s81
      %s83 = sphi 0, %s81
      %s84 = sphi 0, %s83
      %s98 = sphi 0, %s84
      %s106 = sphi 0, %s108
      %s109 = sphi 0, %s106
      %s110 = sphi 0, %s109
      %s126 = sphi 0, %s110
    $region4: #{tpu_custom_call.1} parent=1 // loop_header_branch
      %15 = sbr.rel (%p13) target = $region8
    $region5: #{tpu_custom_call.1} parent=1 // loop_body
      %s17 = ssub.s32 %s12, 1
      %s18 = ssub.s32 %s12, 2
      %s25 = sadd.s32 1, %s20
      %p26 = scmp.ge.s32.totalorder %s25, 1
      %s27 = scalar_select %p26, 0, %s25
      %s28 = sadd.s32 1, %s19
      %s29 = scalar_select %p26, %s28, %s19
      %p30 = scmp.ge.s32.totalorder %s29, 2
      %s31 = scalar_select %p30, 0, %s29
      %s32 = ssub.s32 %s19, %s31
      %s33 = ssub.s32 %s20, %s27
      %s34 = sor.u32 %s32, %s33
      %p35 = scmp.eq.s32.totalorder %s34, 0
      %s37 = sadd.s32 %s36, 1
      %s38 = scalar_select %p35, %s36, %s37
      %p41 = pneg %p35
      %p42 = scmp.eq.s32.totalorder %s12, 1
      %p43 = por %p41, %p42
      %p44 = scmp.ne.s32.totalorder %s36, %s39
      %p45 = scmp.eq.s32.totalorder %s12, 0
      %p46 = por %p44, %p45
      %p47 = scmp.ne.s32.totalorder %s36, %s39
      %p48 = scmp.eq.s32.totalorder %s17, 1
      %p49 = por %p47, %p48
      %p50 = scmp.ne.s32.totalorder %s39, %s40
      %p51 = scmp.eq.s32.totalorder %s17, 0
      %p52 = por %p50, %p51
      %p53 = scmp.ne.s32.totalorder %s39, %s40
      %p54 = scmp.eq.s32.totalorder %s18, 1
      %p55 = por %p53, %p54
      %p57 = scmp.ne.s32.totalorder %s40, %s56
      %p58 = scmp.eq.s32.totalorder %s18, 0
      %p59 = por %p57, %p58
      %s61 = sadd.s32 %s60, 1
      %p64 = scmp.eq.s32.totalorder %s12, 1
      %p65 = scmp.ne.s32.totalorder %s60, %s62
      %p66 = scmp.eq.s32.totalorder %s12, 0
      %p67 = por %p65, %p66
      %p68 = scmp.ne.s32.totalorder %s60, %s62
      %p69 = scmp.eq.s32.totalorder %s17, 1
      %p70 = por %p68, %p69
      %p71 = scmp.ne.s32.totalorder %s62, %s63
      %p72 = scmp.eq.s32.totalorder %s17, 0
      %p73 = por %p71, %p72
      %p74 = scmp.ne.s32.totalorder %s62, %s63
      %p75 = scmp.eq.s32.totalorder %s18, 1
      %p76 = por %p74, %p75
      %p78 = scmp.ne.s32.totalorder %s63, %s77
      %p79 = scmp.eq.s32.totalorder %s18, 0
      %p80 = por %p78, %p79
      %s82 = sadd.s32 %s81, 1
      %p85 = scmp.eq.s32.totalorder %s12, 1
      %p86 = scmp.ne.s32.totalorder %s81, %s83
      %p87 = scmp.eq.s32.totalorder %s12, 0
      %p88 = por %p86, %p87
      %p89 = scmp.ne.s32.totalorder %s81, %s83
      %p90 = scmp.eq.s32.totalorder %s17, 1
      %p91 = por %p89, %p90
      %p92 = scmp.ne.s32.totalorder %s83, %s84
      %p93 = scmp.eq.s32.totalorder %s17, 0
      %p94 = por %p92, %p93
      %p95 = scmp.ne.s32.totalorder %s83, %s84
      %p96 = scmp.eq.s32.totalorder %s18, 1
      %p97 = por %p95, %p96
      %p99 = scmp.ne.s32.totalorder %s84, %s98
      %p100 = scmp.eq.s32.totalorder %s18, 0
      %p101 = por %p99, %p100
      %s102 = ssub.s32 %s19, %s31
      %s103 = ssub.s32 %s20, %s27
      %s104 = sor.u32 %s102, %s103
      %p105 = scmp.eq.s32.totalorder %s104, 0
      %s107 = sadd.s32 %s106, 1
      %s108 = scalar_select %p105, %s106, %s107
      %p111 = pneg %p105
      %p112 = scmp.eq.s32.totalorder %s12, 1
      %p113 = por %p111, %p112
      %p114 = scmp.ne.s32.totalorder %s106, %s109
      %p115 = scmp.eq.s32.totalorder %s12, 0
      %p116 = por %p114, %p115
      %p117 = scmp.ne.s32.totalorder %s106, %s109
      %p118 = scmp.eq.s32.totalorder %s17, 1
      %p119 = por %p117, %p118
      %p120 = scmp.ne.s32.totalorder %s109, %s110
      %p121 = scmp.eq.s32.totalorder %s17, 0
      %p122 = por %p120, %p121
      %p123 = scmp.ne.s32.totalorder %s109, %s110
      %p124 = scmp.eq.s32.totalorder %s18, 1
      %p125 = por %p123, %p124
      %p127 = scmp.ne.s32.totalorder %s110, %s126
      %p128 = scmp.eq.s32.totalorder %s18, 0
      %p129 = por %p127, %p128
      %p130 = scmp.le.s32.totalorder 1, %s12
      %p131 = scmp.lt.s32.totalorder %s12, 3
      %p132 = pnand %p130, %p131
      %p133 = pneg %p132
      // Predicated region
      $region9: #{tpu_custom_call.1} parent=5 // pred_check
        _
      $region10: #{tpu_custom_call.1} parent=5 // pred_check_branch
        %135 = sbr.rel (%p132) target = $region12
      $region11: #{tpu_custom_call.1} parent=5 // pred_region
        %s136 = ssub.s32 %s12, 1
        // Predicated region
        $region13: #{tpu_custom_call.1} parent=11 // pred_check
          %p137 = pneg %p73
        $region14: #{tpu_custom_call.1} parent=11 // pred_check_branch
          %139 = sbr.rel (%p137) target = $region16
        $region15: #{tpu_custom_call.1} parent=11 // pred_region
          _
        $region16: #{tpu_custom_call.1} parent=11 // pred_fallthru
          _
        // Predicated region
        $region17: #{tpu_custom_call.1} parent=11 // pred_check
          %p140 = pneg %p94
        $region18: #{tpu_custom_call.1} parent=11 // pred_check_branch
          %142 = sbr.rel (%p140) target = $region20
        $region19: #{tpu_custom_call.1} parent=11 // pred_region
          _
        $region20: #{tpu_custom_call.1} parent=11 // pred_fallthru
          _
      $region12: #{tpu_custom_call.1} parent=5 // pred_fallthru
        _
      %p143 = scmp.lt.s32.totalorder %s12, 2
      // Predicated region
      $region21: #{tpu_custom_call.1} parent=5 // pred_check
        %p144 = pneg %p143
      $region22: #{tpu_custom_call.1} parent=5 // pred_check_branch
        %146 = sbr.rel (%p144) target = $region24
      $region23: #{tpu_custom_call.1} parent=5 // pred_region
        // Predicated region
        $region25: #{tpu_custom_call.1} parent=23 // pred_check
          %p147 = pneg %p46
        $region26: #{tpu_custom_call.1} parent=23 // pred_check_branch
          %149 = sbr.rel (%p147) target = $region28
        $region27: #{tpu_custom_call.1} parent=23 // pred_region
          %p150 = scmp.lt.s32.totalorder %s19, 1
          %s151 = scalar_select %p150, %s19, 1
          %p152 = scmp.lt.s32.totalorder %s20, 0
          %s153 = scalar_select %p152, %s20, 0
          %s154 = sadd.s32 %s153, %s151
          %s155 = smul.addr %s154, 2
          %s156 = scalar_lea.vmem %s0, %s155
        $region28: #{tpu_custom_call.1} parent=23 // pred_fallthru
          _
      $region24: #{tpu_custom_call.1} parent=5 // pred_fallthru
        _
      %p157 = scmp.le.s32.totalorder 1, %s12
      %p158 = scmp.lt.s32.totalorder %s12, 3
      %p159 = pnand %p157, %p158
      %p160 = pneg %p159
      // Predicated region
      $region29: #{tpu_custom_call.1} parent=5 // pred_check
        _
      $region30: #{tpu_custom_call.1} parent=5 // pred_check_branch
        %162 = sbr.rel (%p159) target = $region32
      $region31: #{tpu_custom_call.1} parent=5 // pred_region
        %s163 = ssub.s32 %s12, 1
        %p164 = scmp.lt.s32.totalorder %s21, 1
        %s165 = scalar_select %p164, %s21, 1
        %p166 = scmp.lt.s32.totalorder %s22, 0
        %s167 = scalar_select %p166, %s22, 0
        %s168 = sadd.s32 %s167, %s165
        %s169 = smul.addr %s168, 2
        %s170 = scalar_lea.vmem %s0, %s169
        %p171 = pneg %p52
        %p172 = pneg %p49
        %p173 = pneg %p73
        %p174 = pneg %p70
        %p175 = pneg %p94
        %p176 = pneg %p91
        %p177 = pneg %p122
        %p178 = pneg %p119
        %s179 = sand.u32 %s109, 1
        %s180 = scalar_lea.sflag [#allocation3], %s179
        %s181 = sand.u32 %s109, 1
        %s182 = smul.addr %s181, 8
        %s183 = scalar_lea.vmem [#allocation2], %s182
        %p184 = scmp.lt.s32.totalorder %s21, 1
        %s185 = scalar_select %p184, %s21, 1
        %p186 = scmp.lt.s32.totalorder %s22, 0
        %s187 = scalar_select %p186, %s22, 0
        %s188 = sadd.s32 %s187, %s185
        %s189 = smul.addr %s188, 2
        %s190 = scalar_lea.vmem %s0, %s189
        %v192 = vld [vmem:[%s1] sm:$0xf]
        %v193 = vld [vmem:[%s190] sm:$0x3]
        %v194 = vld [vmem:[%s2] sm:$0xff]
        %196 = vset.pattern.permute.xlu0 0
        %197 = vperm.xlu0 %196, %v194
        %v198 = vpop.permute.xlu0 %197
        %vm200 = vcmask 31744
        %v202 = vsel %vm200, %v192, 0
        %vm204 = vcmask 1041408
        %v206 = vsel %vm204, %v193, 0
        %208 = vmatpush.bf16.msra.mxu0 0
        %209 = vmatpush.bf16.msra.mxu0 0
        %210 = vmatpush.bf16.msra.mxu0 0
        %211 = vmatpush.bf16.msra.mxu0 0
        %212 = vmatpush.bf16.msra.mxu0 0
        %213 = vmatpush.bf16.msra.mxu0 0
        %214 = vmatpush.bf16.msra.mxu0 0
        %215 = vmatpush.bf16.msra.mxu0 %v206
        %216 = vmatmul.bf16.gmra.mxu0 %v202
        %v217 = vpop.f32.mrf.mxu0
        %v218 = vadd.f32 %v198, %v217
        %v219 = vpop.f32.mrf.mxu0
        %220 = vdwg.mxu0
        %v221 = vmax.f32 %v218, 0.0
        %vm222 = vcmask 130048
        %223 = vst.msk [vmem:[%s183] sm:$0xff] %vm222, %v221
        %s224 = sand.u32 %s109, 1
        %s225 = scalar_lea.sflag [#allocation3], %s224
        %s226 = sand.u32 %s109, 1
        %s227 = smul.addr %s226, 8
        %s228 = scalar_lea.vmem [#allocation2], %s227
        // Predicated region
        $region33: #{tpu_custom_call.1} parent=31 // pred_check
          %p229 = pneg %p119
        $region34: #{tpu_custom_call.1} parent=31 // pred_check_branch
          %231 = sbr.rel (%p229) target = $region36
        $region35: #{tpu_custom_call.1} parent=31 // pred_region
          %233 = vsyncadd %s225, 0
          %s234 = sadd.s32 %s22, %s21
          %s235 = smul.addr %s234, 8
          %s236 = scalar_lea.hbm %s3, %s235
          %s238 = sshll.u32 %s228, 4
          %s239 = int_to_ptr.vmem [resolvable:$true] %s238
          %s240 = sshll.u32 %s236, 4
          %s241 = int_to_ptr.hbm [resolvable:$true] %s240
          %243 = dma.vmem_to_hbm [thread:$0]  %s239, 128, %s241, %s225
        $region36: #{tpu_custom_call.1} parent=31 // pred_fallthru
          _
      $region32: #{tpu_custom_call.1} parent=5 // pred_fallthru
        _
      %p244 = scmp.le.s32.totalorder 2, %s12
      // Predicated region
      $region37: #{tpu_custom_call.1} parent=5 // pred_check
        %p245 = pneg %p244
      $region38: #{tpu_custom_call.1} parent=5 // pred_check_branch
        %247 = sbr.rel (%p245) target = $region40
      $region39: #{tpu_custom_call.1} parent=5 // pred_region
        %s248 = ssub.s32 %s12, 2
        // Predicated region
        $region41: #{tpu_custom_call.1} parent=39 // pred_check
          %p249 = pneg %p125
        $region42: #{tpu_custom_call.1} parent=39 // pred_check_branch
          %251 = sbr.rel (%p249) target = $region44
        $region43: #{tpu_custom_call.1} parent=39 // pred_region
          %s252 = sand.u32 %s110, 1
          %s253 = scalar_lea.sflag [#allocation3], %s252
          %s254 = sand.u32 %s110, 1
          %s255 = smul.addr %s254, 8
          %s256 = scalar_lea.vmem [#allocation2], %s255
          %258 = dma.done %s253, 128
        $region44: #{tpu_custom_call.1} parent=39 // pred_fallthru
          _
      $region40: #{tpu_custom_call.1} parent=5 // pred_fallthru
        _
    $region6: #{tpu_custom_call.1} parent=1 // loop_footer
      %s16 = sadd.s32 1, %s12
    $region7: #{tpu_custom_call.1} parent=1 // loop_footer_branch
      %11 = sbr.rel target = $region3
    $region8: #{tpu_custom_call.1} parent=1 // loop_exit
      _
    %259 = vsyncpa [#allocation3], 1
    %s260 = scalar_lea.sflag [#allocation3], 1
    %261 = vsyncpa %s260, 1

</llo_original>
